<compile_context>
chip_gen: v7x
topology: tpu7x:2x2x1
jax: 0.10.0
libtpu: 0.0.40
codegen_flags: <defaults>
</compile_context>

<pallas_src>
import jax
import jax.numpy as jnp
import numpy as np
from jax import lax
from jax.experimental import pallas as pl
from jax.experimental.pallas import tpu as pltpu

MAX_BLOCK_IMGS = 32     # images per grid step (raise for very large batches)
C1, C2 = 16, 32         # conv1 / conv2 output channels
FC_PAD = 128            # lane-dense padded logits width (real logits = 10)


def _shift(x, s, axis):
    """result[i] = x[(i + s) % n] along `axis` (== jnp.roll(x, -s, axis)).

    Written as an explicit 2-slice concatenate so both the semantics and the
    Mosaic lowering (an XLU rotate / shift) are unambiguous."""
    if s == 0:
        return x
    if axis == 0:
        return jnp.concatenate([x[s:, :], x[:s, :]], axis=0)
    return jnp.concatenate([x[:, s:], x[:, :s]], axis=1)


# ------------------------------ fused kernel --------------------------------

def _fused_kernel(x_ref, w1_ref, b1_ref, w2_ref, b2_ref, wf_ref, bf_ref,
                  sel_ref, o_ref):
    # x_ref : (16B, 64)  row-pair view: x_ref[16b + r, 32p + u] = img[b, 2r+p, u]
    # w1_ref: (256, 256) conv1 weights, rows = 32*i + u, cols = 16*w + c (w>12 zero)
    # b1_ref: (1, 256)
    # w2_ref: (1024, 64) conv2 weights, rows = 256*r + 16*w + cin, cols = 32*ow + cout
    # b2_ref: (1, 64)
    # wf_ref: (32, 128)  FC weights padded to 128 output lanes
    # bf_ref: (1, 128)
    # sel_ref: (B, 16B)  0/1 row-selection matrix (sel[b, 16b] = 1)
    # o_ref : (B, 128)   padded logits
    rows = x_ref[...]                                                # (16B, 64)

    # ---- Conv2d(1,16,8,2) + bias + tanh: ONE fused-K matmul.
    # LHS[16b + h, 32*i + u] = img[b, 2h + i, u]  (valid for h <= 12; rows
    # h = 13..15 hold finite garbage that never reaches a used output).
    lhs = jnp.concatenate([_shift(rows, s, 0) for s in range(4)], axis=1)   # (16B, 256)
    z1 = jnp.tanh(jnp.dot(lhs, w1_ref[...],
                          preferred_element_type=jnp.float32) + b1_ref[...])  # (16B, 256)

    # ---- MaxPool2d(2), un-compacted: valid at even rows (h = 2*ph) and
    # lane groups 32*pw + c; the skip is folded into the conv2 weights.
    hm = jnp.maximum(z1, _shift(z1, 1, 0))            # height pairs (h, h+1)
    p1 = jnp.maximum(hm, _shift(hm, 16, 1))           # width pairs  (w, w+1)

    # ---- Conv2d(16,32,4,2) + bias + tanh: ONE matmul over all row offsets.
    # c2[row, 256*r + col] = p1[row + 2r, col]; meaningful rows = 16b + 4*oh.
    c2 = jnp.concatenate([_shift(p1, 2 * r, 0) for r in range(4)], axis=1)  # (16B, 1024)
    z2 = jnp.tanh(jnp.dot(c2, w2_ref[...],
                          preferred_element_type=jnp.float32) + b2_ref[...])  # (16B, 64)

    # ---- MaxPool2d(2) over the 2x2 conv2 map (-> 1x1): ow in lanes, oh in rows.
    f = jnp.maximum(z2[:, 0:32], z2[:, 32:64])        # max over ow
    f = jnp.maximum(f, _shift(f, 4, 0))               # max over oh; valid at rows 16b

    # ---- Flatten + Linear(32,10): gather one row per image with a constant
    # 0/1 matmul (MXU row gather), then a single lane-dense FC matmul.
    feat = jnp.dot(sel_ref[...], f, preferred_element_type=jnp.float32)      # (B, 32)
    o_ref[...] = jnp.dot(feat, wf_ref[...],
                         preferred_element_type=jnp.float32) + bf_ref[...]   # (B, 128)


# --------------------- one-time weight repacking (hoisted) -------------------

def pack_params(params):
    w1 = np.asarray(params["w1"], np.float32)    # (16, 1, 8, 8)
    b1 = np.asarray(params["b1"], np.float32)    # (16,)
    w2 = np.asarray(params["w2"], np.float32)    # (32, 16, 4, 4)
    b2 = np.asarray(params["b2"], np.float32)    # (32,)
    wfc = np.asarray(params["wfc"], np.float32)  # (10, 32)
    bfc = np.asarray(params["bfc"], np.float32)  # (10,)

    # Conv1: LHS lane = 32*i + u (kernel row i, image col u); output lane =
    # 16*w + c, w = 0..12 (lanes 208..255 zero-padded to 2 full lane groups).
    w1p = np.zeros((256, 256), np.float32)
    for i in range(8):
        for w in range(13):
            for j in range(8):
                w1p[32 * i + 2 * w + j, 16 * w:16 * (w + 1)] = w1[:, 0, i, j]
    b1t = np.zeros((1, 256), np.float32)
    b1t[0, :13 * C1] = np.tile(b1, 13)

    # Conv2: input lane = 16*w + cin of the un-compacted pooled map,
    # row = 256*r + 16*w + cin, col = 32*ow + cout; rows for skipped (odd /
    # out-of-window) w stay zero -- the pool-stride skip lives in the weights.
    w2p = np.zeros((1024, 64), np.float32)
    for r in range(4):
        for ow in range(2):
            for j in range(4):
                w = 4 * ow + 2 * j
                w2p[256 * r + 16 * w:256 * r + 16 * w + 16,
                    32 * ow:32 * ow + 32] = w2[:, :, r, j].T          # (cin, cout)
    b2t = np.tile(b2, 2).reshape(1, 64)

    # FC, zero-padded to 128 output lanes (lane-dense stores).
    wfp = np.zeros((C2, FC_PAD), np.float32)
    wfp[:, :10] = wfc.T
    bfp = np.zeros((1, FC_PAD), np.float32)
    bfp[0, :10] = bfc

    return {k: jnp.asarray(v) for k, v in
            dict(w1p=w1p, b1t=b1t, w2p=w2p, b2t=b2t, wfp=wfp, bfp=bfp).items()}


# ------------------------------ forward wrapper ------------------------------

@jax.jit
def mnist_tanh_forward(x_nchw, packed):
    n = x_nchw.shape[0]
    assert x_nchw.shape[1:] == (1, 32, 32), x_nchw.shape
    x = x_nchw.astype(jnp.float32)

    B = n if n <= MAX_BLOCK_IMGS else MAX_BLOCK_IMGS       # images per grid step
    nblk = (n + B - 1) // B
    n_pad = nblk * B
    if n_pad != n:
        x = jnp.pad(x, ((0, n_pad - n), (0, 0), (0, 0), (0, 0)))

    # Copy-free relayout: (n_pad,1,32,32) -> (16*n_pad, 64); row r of each
    # per-image 16-row block holds image rows 2r and 2r+1 side by side.
    x2 = x.reshape(n_pad * 16, 64)

    # Constant 0/1 per-image row-selection matrix (compile-time constant).
    sel = np.zeros((B, B * 16), np.float32)
    sel[np.arange(B), np.arange(B) * 16] = 1.0
    sel = jnp.asarray(sel)

    out = pl.pallas_call(
        _fused_kernel,
        grid=(nblk,),
        in_specs=[
            pl.BlockSpec((B * 16, 64), lambda i: (i, 0)),    # batched input block
            pl.BlockSpec((256, 256), lambda i: (0, 0)),      # w1p (resident)
            pl.BlockSpec((1, 256), lambda i: (0, 0)),        # b1t
            pl.BlockSpec((1024, 64), lambda i: (0, 0)),      # w2p
            pl.BlockSpec((1, 64), lambda i: (0, 0)),         # b2t
            pl.BlockSpec((C2, FC_PAD), lambda i: (0, 0)),    # wfp (padded)
            pl.BlockSpec((1, FC_PAD), lambda i: (0, 0)),     # bfp (padded)
            pl.BlockSpec((B, B * 16), lambda i: (0, 0)),     # selection matrix
        ],
        out_specs=pl.BlockSpec((B, FC_PAD), lambda i: (i, 0)),
        out_shape=jax.ShapeDtypeStruct((n_pad, FC_PAD), jnp.float32),
        compiler_params=pltpu.CompilerParams(
            dimension_semantics=("parallel",),               # shard batch across TCs
            vmem_limit_bytes=32 * 1024 * 1024),
    )(x2, packed["w1p"], packed["b1t"], packed["w2p"], packed["b2t"],
      packed["wfp"], packed["bfp"], sel)
    return out[:n, :10]


# ----------------------------- pure-JAX reference ----------------------------

def reference_forward(x_nchw, params):
    hp = lax.Precision.HIGHEST
    y = lax.conv_general_dilated(x_nchw, params["w1"], (2, 2), "VALID",
                                 dimension_numbers=("NCHW", "OIHW", "NCHW"),
                                 precision=hp)
    y = jnp.tanh(y + params["b1"][None, :, None, None])
    y = lax.reduce_window(y, -jnp.inf, lax.max, (1, 1, 2, 2), (1, 1, 2, 2), "VALID")
    y = lax.conv_general_dilated(y, params["w2"], (2, 2), "VALID",
                                 dimension_numbers=("NCHW", "OIHW", "NCHW"),
                                 precision=hp)
    y = jnp.tanh(y + params["b2"][None, :, None, None])
    y = lax.reduce_window(y, -jnp.inf, lax.max, (1, 1, 2, 2), (1, 1, 2, 2), "VALID")
    y = y.reshape(y.shape[0], -1)
    return jnp.dot(y, params["wfc"].T, precision=hp) + params["bfc"]


if __name__ == "__main__":
    key = jax.random.PRNGKey(0)
    kx, k1, k2, k3, k4, k5, k6 = jax.random.split(key, 7)
    x = jax.random.normal(kx, (2, 1, 32, 32), jnp.float32)
    params = {
        "w1": 0.05 * jax.random.normal(k1, (16, 1, 8, 8), jnp.float32),
        "b1": 0.05 * jax.random.normal(k2, (16,), jnp.float32),
        "w2": 0.05 * jax.random.normal(k3, (32, 16, 4, 4), jnp.float32),
        "b2": 0.05 * jax.random.normal(k4, (32,), jnp.float32),
        "wfc": 0.05 * jax.random.normal(k5, (10, 32), jnp.float32),
        "bfc": 0.05 * jax.random.normal(k6, (10,), jnp.float32),
    }

    packed = pack_params(params)        # one-time weight repacking (not in hot path)

    out = jax.block_until_ready(mnist_tanh_forward(x, packed))
    ref = jax.block_until_ready(reference_forward(x, params))

    assert out.shape == (2, 10), out.shape
    err = float(np.max(np.abs(np.asarray(out) - np.asarray(ref))))
    # Tolerance absorbs default (bf16-pass) MXU precision vs HIGHEST reference.
    assert np.allclose(np.asarray(out), np.asarray(ref), atol=3e-3, rtol=3e-3), err
    print("KERNEL_OK")
</pallas_src>

<mosaic_0001>
module attributes {stable_mosaic.version = 11 : i64} {
  func.func @_fused_kernel(%arg0: i32, %arg1: memref<32x64xf32, #tpu.memory_space<vmem>>, %arg2: memref<256x256xf32, #tpu.memory_space<vmem>>, %arg3: memref<1x256xf32, #tpu.memory_space<vmem>>, %arg4: memref<1024x64xf32, #tpu.memory_space<vmem>>, %arg5: memref<1x64xf32, #tpu.memory_space<vmem>>, %arg6: memref<32x128xf32, #tpu.memory_space<vmem>>, %arg7: memref<1x128xf32, #tpu.memory_space<vmem>>, %arg8: memref<2x32xf32, #tpu.memory_space<vmem>>, %arg9: memref<2x128xf32, #tpu.memory_space<vmem>>) attributes {dimension_semantics = [#tpu.dimension_semantics<parallel>], iteration_bounds = array<i64: 1>, scalar_prefetch = 0 : i64, scratch_operands = 0 : i64, tpu.core_type = #tpu.core_type<tc>, window_params = [{transform_indices = @transform_0, window_bounds = array<i64: 32, 64>}, {pipeline_mode = #tpu.pipeline_mode<synchronous>, transform_indices = @transform_1, window_bounds = array<i64: 256, 256>}, {pipeline_mode = #tpu.pipeline_mode<synchronous>, transform_indices = @transform_2, window_bounds = array<i64: 1, 256>}, {pipeline_mode = #tpu.pipeline_mode<synchronous>, transform_indices = @transform_3, window_bounds = array<i64: 1024, 64>}, {pipeline_mode = #tpu.pipeline_mode<synchronous>, transform_indices = @transform_4, window_bounds = array<i64: 1, 64>}, {pipeline_mode = #tpu.pipeline_mode<synchronous>, transform_indices = @transform_5, window_bounds = array<i64: 32, 128>}, {pipeline_mode = #tpu.pipeline_mode<synchronous>, transform_indices = @transform_6, window_bounds = array<i64: 1, 128>}, {pipeline_mode = #tpu.pipeline_mode<synchronous>, transform_indices = @transform_7, window_bounds = array<i64: 2, 32>}, {transform_indices = @transform_8, window_bounds = array<i64: 2, 128>}]} {
    %c0 = arith.constant 0 : index
    %c0_0 = arith.constant 0 : index
    %0 = vector.load %arg1[%c0, %c0_0] : memref<32x64xf32, #tpu.memory_space<vmem>>, vector<32x64xf32>
    %1 = vector.extract_strided_slice %0 {offsets = [1, 0], sizes = [31, 64], strides = [1, 1]} : vector<32x64xf32> to vector<31x64xf32>
    %2 = vector.extract_strided_slice %0 {offsets = [0, 0], sizes = [1, 64], strides = [1, 1]} : vector<32x64xf32> to vector<1x64xf32>
    %3 = tpu.concatenate %1, %2 in 0 : vector<31x64xf32>, vector<1x64xf32> -> vector<32x64xf32>
    %4 = vector.extract_strided_slice %0 {offsets = [2, 0], sizes = [30, 64], strides = [1, 1]} : vector<32x64xf32> to vector<30x64xf32>
    %5 = vector.extract_strided_slice %0 {offsets = [0, 0], sizes = [2, 64], strides = [1, 1]} : vector<32x64xf32> to vector<2x64xf32>
    %6 = tpu.concatenate %4, %5 in 0 : vector<30x64xf32>, vector<2x64xf32> -> vector<32x64xf32>
    %7 = vector.extract_strided_slice %0 {offsets = [3, 0], sizes = [29, 64], strides = [1, 1]} : vector<32x64xf32> to vector<29x64xf32>
    %8 = vector.extract_strided_slice %0 {offsets = [0, 0], sizes = [3, 64], strides = [1, 1]} : vector<32x64xf32> to vector<3x64xf32>
    %9 = tpu.concatenate %7, %8 in 0 : vector<29x64xf32>, vector<3x64xf32> -> vector<32x64xf32>
    %10 = tpu.concatenate %0, %3, %6, %9 in 1 : vector<32x64xf32>, vector<32x64xf32>, vector<32x64xf32>, vector<32x64xf32> -> vector<32x256xf32>
    %c0_1 = arith.constant 0 : index
    %c0_2 = arith.constant 0 : index
    %11 = vector.load %arg2[%c0_1, %c0_2] : memref<256x256xf32, #tpu.memory_space<vmem>>, vector<256x256xf32>
    %cst = arith.constant dense<0.000000e+00> : vector<32x256xf32>
    %12 = tpu.matmul %10, %11, %cst {dimension_numbers = #tpu.dot_dimension_numbers<[1], [0], [0], [1], [0, 0, 1, 1], [], []>} : vector<32x256xf32>, vector<256x256xf32>, vector<32x256xf32> -> vector<32x256xf32>
    %c0_3 = arith.constant 0 : index
    %c0_4 = arith.constant 0 : index
    %13 = vector.load %arg3[%c0_3, %c0_4] : memref<1x256xf32, #tpu.memory_space<vmem>>, vector<1x256xf32>
    %14 = vector.broadcast %13 : vector<1x256xf32> to vector<32x256xf32>
    %15 = arith.addf %12, %14 : vector<32x256xf32>
    %16 = math.tanh %15 : vector<32x256xf32>
    %17 = vector.extract_strided_slice %16 {offsets = [1, 0], sizes = [31, 256], strides = [1, 1]} : vector<32x256xf32> to vector<31x256xf32>
    %18 = vector.extract_strided_slice %16 {offsets = [0, 0], sizes = [1, 256], strides = [1, 1]} : vector<32x256xf32> to vector<1x256xf32>
    %19 = tpu.concatenate %17, %18 in 0 : vector<31x256xf32>, vector<1x256xf32> -> vector<32x256xf32>
    %20 = arith.maximumf %16, %19 : vector<32x256xf32>
    %21 = vector.extract_strided_slice %20 {offsets = [0, 16], sizes = [32, 240], strides = [1, 1]} : vector<32x256xf32> to vector<32x240xf32>
    %22 = vector.extract_strided_slice %20 {offsets = [0, 0], sizes = [32, 16], strides = [1, 1]} : vector<32x256xf32> to vector<32x16xf32>
    %23 = tpu.concatenate %21, %22 in 1 : vector<32x240xf32>, vector<32x16xf32> -> vector<32x256xf32>
    %24 = arith.maximumf %20, %23 : vector<32x256xf32>
    %25 = vector.extract_strided_slice %24 {offsets = [2, 0], sizes = [30, 256], strides = [1, 1]} : vector<32x256xf32> to vector<30x256xf32>
    %26 = vector.extract_strided_slice %24 {offsets = [0, 0], sizes = [2, 256], strides = [1, 1]} : vector<32x256xf32> to vector<2x256xf32>
    %27 = tpu.concatenate %25, %26 in 0 : vector<30x256xf32>, vector<2x256xf32> -> vector<32x256xf32>
    %28 = vector.extract_strided_slice %24 {offsets = [4, 0], sizes = [28, 256], strides = [1, 1]} : vector<32x256xf32> to vector<28x256xf32>
    %29 = vector.extract_strided_slice %24 {offsets = [0, 0], sizes = [4, 256], strides = [1, 1]} : vector<32x256xf32> to vector<4x256xf32>
    %30 = tpu.concatenate %28, %29 in 0 : vector<28x256xf32>, vector<4x256xf32> -> vector<32x256xf32>
    %31 = vector.extract_strided_slice %24 {offsets = [6, 0], sizes = [26, 256], strides = [1, 1]} : vector<32x256xf32> to vector<26x256xf32>
    %32 = vector.extract_strided_slice %24 {offsets = [0, 0], sizes = [6, 256], strides = [1, 1]} : vector<32x256xf32> to vector<6x256xf32>
    %33 = tpu.concatenate %31, %32 in 0 : vector<26x256xf32>, vector<6x256xf32> -> vector<32x256xf32>
    %34 = tpu.concatenate %24, %27, %30, %33 in 1 : vector<32x256xf32>, vector<32x256xf32>, vector<32x256xf32>, vector<32x256xf32> -> vector<32x1024xf32>
    %c0_5 = arith.constant 0 : index
    %c0_6 = arith.constant 0 : index
    %35 = vector.load %arg4[%c0_5, %c0_6] : memref<1024x64xf32, #tpu.memory_space<vmem>>, vector<1024x64xf32>
    %cst_7 = arith.constant dense<0.000000e+00> : vector<32x64xf32>
    %36 = tpu.matmul %34, %35, %cst_7 {dimension_numbers = #tpu.dot_dimension_numbers<[1], [0], [0], [1], [0, 0, 1, 1], [], []>} : vector<32x1024xf32>, vector<1024x64xf32>, vector<32x64xf32> -> vector<32x64xf32>
    %c0_8 = arith.constant 0 : index
    %c0_9 = arith.constant 0 : index
    %37 = vector.load %arg5[%c0_8, %c0_9] : memref<1x64xf32, #tpu.memory_space<vmem>>, vector<1x64xf32>
    %38 = vector.broadcast %37 : vector<1x64xf32> to vector<32x64xf32>
    %39 = arith.addf %36, %38 : vector<32x64xf32>
    %40 = math.tanh %39 : vector<32x64xf32>
    %41 = vector.extract_strided_slice %40 {offsets = [0, 0], sizes = [32, 32], strides = [1, 1]} : vector<32x64xf32> to vector<32x32xf32>
    %42 = vector.extract_strided_slice %40 {offsets = [0, 32], sizes = [32, 32], strides = [1, 1]} : vector<32x64xf32> to vector<32x32xf32>
    %43 = arith.maximumf %41, %42 : vector<32x32xf32>
    %44 = vector.extract_strided_slice %43 {offsets = [4, 0], sizes = [28, 32], strides = [1, 1]} : vector<32x32xf32> to vector<28x32xf32>
    %45 = vector.extract_strided_slice %43 {offsets = [0, 0], sizes = [4, 32], strides = [1, 1]} : vector<32x32xf32> to vector<4x32xf32>
    %46 = tpu.concatenate %44, %45 in 0 : vector<28x32xf32>, vector<4x32xf32> -> vector<32x32xf32>
    %47 = arith.maximumf %43, %46 : vector<32x32xf32>
    %c0_10 = arith.constant 0 : index
    %c0_11 = arith.constant 0 : index
    %48 = vector.load %arg8[%c0_10, %c0_11] : memref<2x32xf32, #tpu.memory_space<vmem>>, vector<2x32xf32>
    %cst_12 = arith.constant dense<0.000000e+00> : vector<2x32xf32>
    %49 = tpu.matmul %48, %47, %cst_12 {dimension_numbers = #tpu.dot_dimension_numbers<[1], [0], [0], [1], [0, 0, 1, 1], [], []>} : vector<2x32xf32>, vector<32x32xf32>, vector<2x32xf32> -> vector<2x32xf32>
    %c0_13 = arith.constant 0 : index
    %c0_14 = arith.constant 0 : index
    %50 = vector.load %arg6[%c0_13, %c0_14] : memref<32x128xf32, #tpu.memory_space<vmem>>, vector<32x128xf32>
    %cst_15 = arith.constant dense<0.000000e+00> : vector<2x128xf32>
    %51 = tpu.matmul %49, %50, %cst_15 {dimension_numbers = #tpu.dot_dimension_numbers<[1], [0], [0], [1], [0, 0, 1, 1], [], []>} : vector<2x32xf32>, vector<32x128xf32>, vector<2x128xf32> -> vector<2x128xf32>
    %c0_16 = arith.constant 0 : index
    %c0_17 = arith.constant 0 : index
    %52 = vector.load %arg7[%c0_16, %c0_17] : memref<1x128xf32, #tpu.memory_space<vmem>>, vector<1x128xf32>
    %53 = vector.broadcast %52 : vector<1x128xf32> to vector<2x128xf32>
    %54 = arith.addf %51, %53 : vector<2x128xf32>
    %c0_18 = arith.constant 0 : index
    %c0_19 = arith.constant 0 : index
    %55 = vector.load %arg9[%c0_18, %c0_19] : memref<2x128xf32, #tpu.memory_space<vmem>>, vector<2x128xf32>
    tpu.vector_store %arg9[%c0_18, %c0_19], %54 {strides = array<i32>} : memref<2x128xf32, #tpu.memory_space<vmem>>, vector<2x128xf32>,
    return
  }
  func.func @transform_0(%arg0: i32) -> (i32, i32) {
    %c0_i32 = arith.constant 0 : i32
    %c0_i32_0 = arith.constant 0 : i32
    return %arg0, %c0_i32 : i32, i32
  }
  func.func @transform_1(%arg0: i32) -> (i32, i32) {
    %c0_i32 = arith.constant 0 : i32
    %c0_i32_0 = arith.constant 0 : i32
    %c0_i32_1 = arith.constant 0 : i32
    return %c0_i32, %c0_i32_0 : i32, i32
  }
  func.func @transform_2(%arg0: i32) -> (i32, i32) {
    %c0_i32 = arith.constant 0 : i32
    %c0_i32_0 = arith.constant 0 : i32
    %c0_i32_1 = arith.constant 0 : i32
    return %c0_i32, %c0_i32_0 : i32, i32
  }
  func.func @transform_3(%arg0: i32) -> (i32, i32) {
    %c0_i32 = arith.constant 0 : i32
    %c0_i32_0 = arith.constant 0 : i32
    %c0_i32_1 = arith.constant 0 : i32
    return %c0_i32, %c0_i32_0 : i32, i32
  }
  func.func @transform_4(%arg0: i32) -> (i32, i32) {
    %c0_i32 = arith.constant 0 : i32
    %c0_i32_0 = arith.constant 0 : i32
    %c0_i32_1 = arith.constant 0 : i32
    return %c0_i32, %c0_i32_0 : i32, i32
  }
  func.func @transform_5(%arg0: i32) -> (i32, i32) {
    %c0_i32 = arith.constant 0 : i32
    %c0_i32_0 = arith.constant 0 : i32
    %c0_i32_1 = arith.constant 0 : i32
    return %c0_i32, %c0_i32_0 : i32, i32
  }
  func.func @transform_6(%arg0: i32) -> (i32, i32) {
    %c0_i32 = arith.constant 0 : i32
    %c0_i32_0 = arith.constant 0 : i32
    %c0_i32_1 = arith.constant 0 : i32
    return %c0_i32, %c0_i32_0 : i32, i32
  }
  func.func @transform_7(%arg0: i32) -> (i32, i32) {
    %c0_i32 = arith.constant 0 : i32
    %c0_i32_0 = arith.constant 0 : i32
    %c0_i32_1 = arith.constant 0 : i32
    return %c0_i32, %c0_i32_0 : i32, i32
  }
  func.func @transform_8(%arg0: i32) -> (i32, i32) {
    %c0_i32 = arith.constant 0 : i32
    %c0_i32_0 = arith.constant 0 : i32
    return %arg0, %c0_i32 : i32, i32
  }
}

</mosaic_0001>

<llo_original>
// kernel: mnist_tanh_forward.1
$region0: #{mnist_tanh_forward.1}
  #allocation0 [shape = 'u32[]', space=smem, size = 0x4, offset = 0x4, fixed_abs, tag = 'smem constant byte address 0x4 - core index']
  #allocation1 [shape = 'u32[144,128]{1,0:T(1,128)}', space=vmem, size = 0x12000, scoped, tag = 'internal scratch']
  %s0 = inlined_call_operand.vmem [shape: f32[32,64], index: 0, kind: input, shape index: {}]
  %s1 = inlined_call_operand.vmem [shape: f32[256,256], index: 1, kind: input, shape index: {}]
  %s2 = inlined_call_operand.vmem [shape: f32[1,256], index: 2, kind: input, shape index: {}]
  %s3 = inlined_call_operand.vmem [shape: f32[1024,64], index: 3, kind: input, shape index: {}]
  %s4 = inlined_call_operand.vmem [shape: f32[1,64], index: 4, kind: input, shape index: {}]
  %s5 = inlined_call_operand.vmem [shape: f32[32,128], index: 5, kind: input, shape index: {}]
  %s6 = inlined_call_operand.vmem [shape: f32[1,128], index: 6, kind: input, shape index: {}]
  %s7 = inlined_call_operand.vmem [shape: f32[2,32], index: 7, kind: input, shape index: {}]
  %s8 = inlined_call_operand.hbm [shape: f32[2,128], index: 8, kind: output, shape index: {}]
  %s9 = sld [smem:[#allocation0]]
  $region42: #{mnist_tanh_forward.1} parent=0
    _
  %s11 = ssub.s32 1, %s9
  %s12 = scalar_select 0, %s11, %s9
  $region1: #{mnist_tanh_forward.1} parent=0
    #allocation2 [shape = 'u8[1024]{0}', space=vmem, size = 0x400, scoped, tag = 'output window, operand 0, single buffered']
    #allocation3 [shape = 's32[1]{0}', space=sflag, size = 0x4, scoped, tag = 'scoped memory for mnist_tanh_forward.1']
    %13 = vsyncpa [#allocation3], 0
    // Predicated region
    $region2: #{mnist_tanh_forward.1} parent=1 // pred_check
      _
    $region3: #{mnist_tanh_forward.1} parent=1 // pred_check_branch
      %15 = sbr.rel (0) target = $region5
    $region4: #{mnist_tanh_forward.1} parent=1 // pred_region
      _
    $region5: #{mnist_tanh_forward.1} parent=1 // pred_fallthru
      _
    // Predicated region
    $region6: #{mnist_tanh_forward.1} parent=1 // pred_check
      _
    $region7: #{mnist_tanh_forward.1} parent=1 // pred_check_branch
      %17 = sbr.rel (0) target = $region9
    $region8: #{mnist_tanh_forward.1} parent=1 // pred_region
      _
    $region9: #{mnist_tanh_forward.1} parent=1 // pred_fallthru
      _
    // Predicated region
    $region10: #{mnist_tanh_forward.1} parent=1 // pred_check
      _
    $region11: #{mnist_tanh_forward.1} parent=1 // pred_check_branch
      %19 = sbr.rel (0) target = $region13
    $region12: #{mnist_tanh_forward.1} parent=1 // pred_region
      _
    $region13: #{mnist_tanh_forward.1} parent=1 // pred_fallthru
      _
    // Predicated region
    $region14: #{mnist_tanh_forward.1} parent=1 // pred_check
      _
    $region15: #{mnist_tanh_forward.1} parent=1 // pred_check_branch
      %21 = sbr.rel (0) target = $region17
    $region16: #{mnist_tanh_forward.1} parent=1 // pred_region
      _
    $region17: #{mnist_tanh_forward.1} parent=1 // pred_fallthru
      _
    // Predicated region
    $region18: #{mnist_tanh_forward.1} parent=1 // pred_check
      _
    $region19: #{mnist_tanh_forward.1} parent=1 // pred_check_branch
      %23 = sbr.rel (0) target = $region21
    $region20: #{mnist_tanh_forward.1} parent=1 // pred_region
      _
    $region21: #{mnist_tanh_forward.1} parent=1 // pred_fallthru
      _
    // Predicated region
    $region22: #{mnist_tanh_forward.1} parent=1 // pred_check
      _
    $region23: #{mnist_tanh_forward.1} parent=1 // pred_check_branch
      %25 = sbr.rel (0) target = $region25
    $region24: #{mnist_tanh_forward.1} parent=1 // pred_region
      _
    $region25: #{mnist_tanh_forward.1} parent=1 // pred_fallthru
      _
    // Predicated region
    $region26: #{mnist_tanh_forward.1} parent=1 // pred_check
      _
    $region27: #{mnist_tanh_forward.1} parent=1 // pred_check_branch
      %27 = sbr.rel (0) target = $region29
    $region28: #{mnist_tanh_forward.1} parent=1 // pred_region
      _
    $region29: #{mnist_tanh_forward.1} parent=1 // pred_fallthru
      _
    // Predicated region
    $region30: #{mnist_tanh_forward.1} parent=1 // pred_check
      _
    $region31: #{mnist_tanh_forward.1} parent=1 // pred_check_branch
      %29 = sbr.rel (0) target = $region33
    $region32: #{mnist_tanh_forward.1} parent=1 // pred_region
      _
    $region33: #{mnist_tanh_forward.1} parent=1 // pred_fallthru
      _
    %v30 = vld [vmem:[%s0] sm:$0xff]
    %v31 = vld [vmem:[%s0 + $0x8] sm:$0xff]
    %v32 = vld [vmem:[%s0 + $0x10] sm:$0xff]
    %v33 = vld [vmem:[%s0 + $0x18] sm:$0xff]
    %vm38 = vcmask 1046528
    %v39 = vrot.slane %v30, 1
    %v40 = vrot.slane %v31, 1
    %v41 = vsel %vm38, %v39, %v40
    %v42 = vrot.slane %v32, 1
    %v43 = vsel %vm38, %v40, %v42
    %v44 = vrot.slane %v33, 1
    %v45 = vsel %vm38, %v42, %v44
    %v48 = vsel %vm38, %v44, %v39
    %vm49 = vcmask 1045504
    %v50 = vrot.slane %v30, 2
    %v51 = vrot.slane %v31, 2
    %v52 = vsel %vm49, %v50, %v51
    %v53 = vrot.slane %v32, 2
    %v54 = vsel %vm49, %v51, %v53
    %v55 = vrot.slane %v33, 2
    %v56 = vsel %vm49, %v53, %v55
    %v62 = vsel %vm49, %v55, %v50
    %vm63 = vcmask 1044480
    %v64 = vrot.slane %v30, 3
    %v65 = vrot.slane %v31, 3
    %v66 = vsel %vm63, %v64, %v65
    %v67 = vrot.slane %v32, 3
    %v68 = vsel %vm63, %v65, %v67
    %v69 = vrot.slane %v33, 3
    %v70 = vsel %vm63, %v67, %v69
    %v73 = vsel %vm63, %v69, %v64
    %75 = vrot.lane.b32.xlu0 %v41, 64
    %v76 = vpop.permute.xlu0 %75
    %77 = vrot.lane.b32.xlu0 %v43, 64
    %v78 = vpop.permute.xlu0 %77
    %79 = vrot.lane.b32.xlu0 %v45, 64
    %v80 = vpop.permute.xlu0 %79
    %81 = vrot.lane.b32.xlu0 %v48, 64
    %v82 = vpop.permute.xlu0 %81
    %88 = vrot.lane.b32.xlu0 %v66, 64
    %v89 = vpop.permute.xlu0 %88
    %90 = vrot.lane.b32.xlu0 %v68, 64
    %v91 = vpop.permute.xlu0 %90
    %92 = vrot.lane.b32.xlu0 %v70, 64
    %v93 = vpop.permute.xlu0 %92
    %94 = vrot.lane.b32.xlu0 %v73, 64
    %v95 = vpop.permute.xlu0 %94
    %vm100 = vcmask 523264
    %v101 = vsel %vm100, %v30, %v76
    %v102 = vsel %vm100, %v31, %v78
    %v103 = vsel %vm100, %v32, %v80
    %v104 = vsel %vm100, %v33, %v82
    %v105 = vsel %vm100, %v52, %v89
    %v106 = vsel %vm100, %v54, %v91
    %v107 = vsel %vm100, %v56, %v93
    %v108 = vsel %vm100, %v62, %v95
    %v109 = vld [vmem:[%s1] sm:$0xff]
    %v110 = vld [vmem:[%s1 + $0x8] sm:$0xff]
    %v111 = vld [vmem:[%s1 + $0x10] sm:$0xff]
    %v112 = vld [vmem:[%s1 + $0x18] sm:$0xff]
    %v113 = vld [vmem:[%s1 + $0x20] sm:$0xff]
    %v114 = vld [vmem:[%s1 + $0x28] sm:$0xff]
    %v115 = vld [vmem:[%s1 + $0x30] sm:$0xff]
    %v116 = vld [vmem:[%s1 + $0x38] sm:$0xff]
    %v117 = vld [vmem:[%s1 + $0x40] sm:$0xff]
    %v118 = vld [vmem:[%s1 + $0x48] sm:$0xff]
    %v119 = vld [vmem:[%s1 + $0x50] sm:$0xff]
    %v120 = vld [vmem:[%s1 + $0x58] sm:$0xff]
    %v121 = vld [vmem:[%s1 + $0x60] sm:$0xff]
    %v122 = vld [vmem:[%s1 + $0x68] sm:$0xff]
    %v123 = vld [vmem:[%s1 + $0x70] sm:$0xff]
    %v124 = vld [vmem:[%s1 + $0x78] sm:$0xff]
    %v125 = vld [vmem:[%s1 + $0x80] sm:$0xff]
    %v126 = vld [vmem:[%s1 + $0x88] sm:$0xff]
    %v127 = vld [vmem:[%s1 + $0x90] sm:$0xff]
    %v128 = vld [vmem:[%s1 + $0x98] sm:$0xff]
    %v129 = vld [vmem:[%s1 + $0xa0] sm:$0xff]
    %v130 = vld [vmem:[%s1 + $0xa8] sm:$0xff]
    %v131 = vld [vmem:[%s1 + $0xb0] sm:$0xff]
    %v132 = vld [vmem:[%s1 + $0xb8] sm:$0xff]
    %v133 = vld [vmem:[%s1 + $0xc0] sm:$0xff]
    %v134 = vld [vmem:[%s1 + $0xc8] sm:$0xff]
    %v135 = vld [vmem:[%s1 + $0xd0] sm:$0xff]
    %v136 = vld [vmem:[%s1 + $0xd8] sm:$0xff]
    %v137 = vld [vmem:[%s1 + $0xe0] sm:$0xff]
    %v138 = vld [vmem:[%s1 + $0xe8] sm:$0xff]
    %v139 = vld [vmem:[%s1 + $0xf0] sm:$0xff]
    %v140 = vld [vmem:[%s1 + $0xf8] sm:$0xff]
    %v141 = vld [vmem:[%s1 + $0x100] sm:$0xff]
    %v142 = vld [vmem:[%s1 + $0x108] sm:$0xff]
    %v143 = vld [vmem:[%s1 + $0x110] sm:$0xff]
    %v144 = vld [vmem:[%s1 + $0x118] sm:$0xff]
    %v145 = vld [vmem:[%s1 + $0x120] sm:$0xff]
    %v146 = vld [vmem:[%s1 + $0x128] sm:$0xff]
    %v147 = vld [vmem:[%s1 + $0x130] sm:$0xff]
    %v148 = vld [vmem:[%s1 + $0x138] sm:$0xff]
    %v149 = vld [vmem:[%s1 + $0x140] sm:$0xff]
    %v150 = vld [vmem:[%s1 + $0x148] sm:$0xff]
    %v151 = vld [vmem:[%s1 + $0x150] sm:$0xff]
    %v152 = vld [vmem:[%s1 + $0x158] sm:$0xff]
    %v153 = vld [vmem:[%s1 + $0x160] sm:$0xff]
    %v154 = vld [vmem:[%s1 + $0x168] sm:$0xff]
    %v155 = vld [vmem:[%s1 + $0x170] sm:$0xff]
    %v156 = vld [vmem:[%s1 + $0x178] sm:$0xff]
    %v157 = vld [vmem:[%s1 + $0x180] sm:$0xff]
    %v158 = vld [vmem:[%s1 + $0x188] sm:$0xff]
    %v159 = vld [vmem:[%s1 + $0x190] sm:$0xff]
    %v160 = vld [vmem:[%s1 + $0x198] sm:$0xff]
    %v161 = vld [vmem:[%s1 + $0x1a0] sm:$0xff]
    %v162 = vld [vmem:[%s1 + $0x1a8] sm:$0xff]
    %v163 = vld [vmem:[%s1 + $0x1b0] sm:$0xff]
    %v164 = vld [vmem:[%s1 + $0x1b8] sm:$0xff]
    %v165 = vld [vmem:[%s1 + $0x1c0] sm:$0xff]
    %v166 = vld [vmem:[%s1 + $0x1c8] sm:$0xff]
    %v167 = vld [vmem:[%s1 + $0x1d0] sm:$0xff]
    %v168 = vld [vmem:[%s1 + $0x1d8] sm:$0xff]
    %v169 = vld [vmem:[%s1 + $0x1e0] sm:$0xff]
    %v170 = vld [vmem:[%s1 + $0x1e8] sm:$0xff]
    %v171 = vld [vmem:[%s1 + $0x1f0] sm:$0xff]
    %v172 = vld [vmem:[%s1 + $0x1f8] sm:$0xff]
    %v173 = vld [vmem:[%s2] sm:$0x3]
    %v175 = vlaneseq
    %v176 = vshrl.u32 %v175, 7
    %v177 = vsub.s32 0, %v176
    %v178 = vrot.slane %v173, %v177
    %v179 = vlaneseq
    %v180 = vshrl.u32 %v179, 7
    %v181 = vsub.s32 1, %v180
    %v182 = vrot.slane %v173, %v181
    %185 = vmatprep.subr.mxu0 %v110
    %186 = vmatpush1.msra.mxu0 %v109
    %187 = vmatprep.subr.mxu0 %v112
    %188 = vmatpush1.msra.mxu0 %v111
    %189 = vmatprep.subr.mxu0 %v114
    %190 = vmatpush1.msra.mxu0 %v113
    %191 = vmatprep.subr.mxu0 %v116
    %192 = vmatpush1.msra.mxu0 %v115
    %193 = vmatprep.subr.mxu0 %v118
    %194 = vmatpush1.msra.mxu0 %v117
    %195 = vmatprep.subr.mxu0 %v120
    %196 = vmatpush1.msra.mxu0 %v119
    %197 = vmatprep.subr.mxu0 %v122
    %198 = vmatpush1.msra.mxu0 %v121
    %199 = vmatprep.subr.mxu0 %v124
    %200 = vmatpush1.msra.mxu0 %v123
    %201 = vmatprep.subr.mxu0 %v126
    %202 = vmatpush1.msra.mxu0 %v125
    %203 = vmatprep.subr.mxu0 %v128
    %204 = vmatpush1.msra.mxu0 %v127
    %205 = vmatprep.subr.mxu0 %v130
    %206 = vmatpush1.msra.mxu0 %v129
    %207 = vmatprep.subr.mxu0 %v132
    %208 = vmatpush1.msra.mxu0 %v131
    %209 = vmatprep.subr.mxu0 %v134
    %210 = vmatpush1.msra.mxu0 %v133
    %211 = vmatprep.subr.mxu0 %v136
    %212 = vmatpush1.msra.mxu0 %v135
    %213 = vmatprep.subr.mxu0 %v138
    %214 = vmatpush1.msra.mxu0 %v137
    %215 = vmatprep.subr.mxu0 %v140
    %216 = vmatpush1.msra.mxu0 %v139
    %217 = vmatprep.subr.mxu0 %v142
    %218 = vmatpush1.msra.mxu0 %v141
    %219 = vmatprep.subr.mxu0 %v144
    %220 = vmatpush1.msra.mxu0 %v143
    %221 = vmatprep.subr.mxu0 %v146
    %222 = vmatpush1.msra.mxu0 %v145
    %223 = vmatprep.subr.mxu0 %v148
    %224 = vmatpush1.msra.mxu0 %v147
    %225 = vmatprep.subr.mxu0 %v150
    %226 = vmatpush1.msra.mxu0 %v149
    %227 = vmatprep.subr.mxu0 %v152
    %228 = vmatpush1.msra.mxu0 %v151
    %229 = vmatprep.subr.mxu0 %v154
    %230 = vmatpush1.msra.mxu0 %v153
    %231 = vmatprep.subr.mxu0 %v156
    %232 = vmatpush1.msra.mxu0 %v155
    %233 = vmatprep.subr.mxu0 %v158
    %234 = vmatpush1.msra.mxu0 %v157
    %235 = vmatprep.subr.mxu0 %v160
    %236 = vmatpush1.msra.mxu0 %v159
    %237 = vmatprep.subr.mxu0 %v162
    %238 = vmatpush1.msra.mxu0 %v161
    %239 = vmatprep.subr.mxu0 %v164
    %240 = vmatpush1.msra.mxu0 %v163
    %241 = vmatprep.subr.mxu0 %v166
    %242 = vmatpush1.msra.mxu0 %v165
    %243 = vmatprep.subr.mxu0 %v168
    %244 = vmatpush1.msra.mxu0 %v167
    %245 = vmatprep.subr.mxu0 %v170
    %246 = vmatpush1.msra.mxu0 %v169
    %247 = vmatprep.subr.mxu0 %v172
    %248 = vmatpush1.msra.mxu0 %v171
    %249 = vmatprep.mubr.f32.mxu0 %v105
    %250 = vmatmul.mubr.f32.gmra.mrb[0].mxu0 %v101
    %v251 = vpop.f32.mrb[0].mxu0
    %v252 = vadd.f32 %v178, %v251
    %v253 = vpop.f32.mrb[0].mxu0
    %v254 = vadd.f32 %v182, %v253
    %255 = vmatprep.mubr.f32.mxu0 %v106
    %256 = vmatmul.mubr.f32.gmra.mrb[0].mxu0 %v102
    %v257 = vpop.f32.mrb[0].mxu0
    %v258 = vadd.f32 %v178, %v257
    %v259 = vpop.f32.mrb[0].mxu0
    %v260 = vadd.f32 %v182, %v259
    %261 = vmatprep.mubr.f32.mxu0 %v107
    %262 = vmatmul.mubr.f32.gmra.mrb[0].mxu0 %v103
    %v263 = vpop.f32.mrb[0].mxu0
    %v264 = vadd.f32 %v178, %v263
    %v265 = vpop.f32.mrb[0].mxu0
    %v266 = vadd.f32 %v182, %v265
    %267 = vmatprep.mubr.f32.mxu0 %v108
    %268 = vmatmul.mubr.f32.gmra.mrb[0].mxu0 %v104
    %v269 = vpop.f32.mrb[0].mxu0
    %v270 = vadd.f32 %v178, %v269
    %v271 = vpop.f32.mrb[0].mxu0
    %v272 = vadd.f32 %v182, %v271
    %273 = vdwg.mxu0
    %v274 = vtanh.pop %v252
    %v275 = vtanh.pop %v254
    %v276 = vtanh.pop %v258
    %v277 = vtanh.pop %v260
    %v278 = vtanh.pop %v264
    %v279 = vtanh.pop %v266
    %v280 = vtanh.pop %v270
    %v281 = vtanh.pop %v272
    %v290 = vrot.slane %v274, 1
    %v291 = vrot.slane %v276, 1
    %v292 = vsel %vm38, %v290, %v291
    %v293 = vrot.slane %v275, 1
    %v294 = vrot.slane %v277, 1
    %v295 = vsel %vm38, %v293, %v294
    %v296 = vrot.slane %v278, 1
    %v297 = vsel %vm38, %v291, %v296
    %v298 = vrot.slane %v279, 1
    %v299 = vsel %vm38, %v294, %v298
    %v300 = vrot.slane %v280, 1
    %v301 = vsel %vm38, %v296, %v300
    %v302 = vrot.slane %v281, 1
    %v303 = vsel %vm38, %v298, %v302
    %v314 = vsel %vm38, %v300, %v290
    %v315 = vsel %vm38, %v302, %v293
    %v316 = vmax.f32 %v274, %v292
    %v317 = vmax.f32 %v275, %v295
    %v318 = vmax.f32 %v276, %v297
    %v319 = vmax.f32 %v277, %v299
    %v320 = vmax.f32 %v278, %v301
    %v321 = vmax.f32 %v279, %v303
    %v322 = vmax.f32 %v280, %v314
    %v323 = vmax.f32 %v281, %v315
    %332 = vrot.lane.b32.xlu0 %v316, 112
    %v333 = vpop.permute.xlu0 %332
    %334 = vrot.lane.b32.xlu0 %v317, 112
    %v335 = vpop.permute.xlu0 %334
    %336 = vrot.lane.b32.xlu0 %v318, 112
    %v337 = vpop.permute.xlu0 %336
    %338 = vrot.lane.b32.xlu0 %v319, 112
    %v339 = vpop.permute.xlu0 %338
    %340 = vrot.lane.b32.xlu0 %v320, 112
    %v341 = vpop.permute.xlu0 %340
    %342 = vrot.lane.b32.xlu0 %v321, 112
    %v343 = vpop.permute.xlu0 %342
    %344 = vrot.lane.b32.xlu0 %v322, 112
    %v345 = vpop.permute.xlu0 %344
    %346 = vrot.lane.b32.xlu0 %v323, 112
    %v347 = vpop.permute.xlu0 %346
    %vm348 = vcmask 916480
    %v349 = vsel %vm348, %v333, %v335
    %v350 = vsel %vm348, %v337, %v339
    %v351 = vsel %vm348, %v341, %v343
    %v352 = vsel %vm348, %v345, %v347
    %v365 = vsel %vm348, %v335, %v333
    %v366 = vsel %vm348, %v339, %v337
    %v367 = vsel %vm348, %v343, %v341
    %v368 = vsel %vm348, %v347, %v345
    %v369 = vmax.f32 %v316, %v349
    %v370 = vmax.f32 %v317, %v365
    %v371 = vmax.f32 %v318, %v350
    %v372 = vmax.f32 %v319, %v366
    %v373 = vmax.f32 %v320, %v351
    %v374 = vmax.f32 %v321, %v367
    %v375 = vmax.f32 %v322, %v352
    %v376 = vmax.f32 %v323, %v368
    %v385 = vrot.slane %v369, 2
    %v386 = vrot.slane %v371, 2
    %v387 = vsel %vm49, %v385, %v386
    %v388 = vrot.slane %v370, 2
    %v389 = vrot.slane %v372, 2
    %v390 = vsel %vm49, %v388, %v389
    %v391 = vrot.slane %v373, 2
    %v392 = vsel %vm49, %v386, %v391
    %v393 = vrot.slane %v374, 2
    %v394 = vsel %vm49, %v389, %v393
    %v395 = vrot.slane %v375, 2
    %v396 = vsel %vm49, %v391, %v395
    %v397 = vrot.slane %v376, 2
    %v398 = vsel %vm49, %v393, %v397
    %v409 = vsel %vm49, %v395, %v385
    %v410 = vsel %vm49, %v397, %v388
    %vm411 = vcmask 1043456
    %v412 = vrot.slane %v369, 4
    %v413 = vrot.slane %v371, 4
    %v414 = vsel %vm411, %v412, %v413
    %v415 = vrot.slane %v370, 4
    %v416 = vrot.slane %v372, 4
    %v417 = vsel %vm411, %v415, %v416
    %v418 = vrot.slane %v373, 4
    %v419 = vsel %vm411, %v413, %v418
    %v420 = vrot.slane %v374, 4
    %v421 = vsel %vm411, %v416, %v420
    %v422 = vrot.slane %v375, 4
    %v423 = vsel %vm411, %v418, %v422
    %v424 = vrot.slane %v376, 4
    %v425 = vsel %vm411, %v420, %v424
    %v436 = vsel %vm411, %v422, %v412
    %v437 = vsel %vm411, %v424, %v415
    %vm438 = vcmask 1041408
    %v439 = vrot.slane %v369, 6
    %v440 = vrot.slane %v371, 6
    %v441 = vsel %vm438, %v439, %v440
    %v442 = vrot.slane %v370, 6
    %v443 = vrot.slane %v372, 6
    %v444 = vsel %vm438, %v442, %v443
    %v445 = vrot.slane %v373, 6
    %v446 = vsel %vm438, %v440, %v445
    %v447 = vrot.slane %v374, 6
    %v448 = vsel %vm438, %v443, %v447
    %v449 = vrot.slane %v375, 6
    %v450 = vsel %vm438, %v445, %v449
    %v451 = vrot.slane %v376, 6
    %v452 = vsel %vm438, %v447, %v451
    %v463 = vsel %vm438, %v449, %v439
    %v464 = vsel %vm438, %v451, %v442
    %v465 = vld [vmem:[%s3] sm:$0xff]
    %v466 = vld [vmem:[%s3 + $0x8] sm:$0xff]
    %v467 = vld [vmem:[%s3 + $0x10] sm:$0xff]
    %v468 = vld [vmem:[%s3 + $0x18] sm:$0xff]
    %v469 = vld [vmem:[%s3 + $0x20] sm:$0xff]
    %v470 = vld [vmem:[%s3 + $0x28] sm:$0xff]
    %v471 = vld [vmem:[%s3 + $0x30] sm:$0xff]
    %v472 = vld [vmem:[%s3 + $0x38] sm:$0xff]
    %v473 = vld [vmem:[%s3 + $0x40] sm:$0xff]
    %v474 = vld [vmem:[%s3 + $0x48] sm:$0xff]
    %v475 = vld [vmem:[%s3 + $0x50] sm:$0xff]
    %v476 = vld [vmem:[%s3 + $0x58] sm:$0xff]
    %v477 = vld [vmem:[%s3 + $0x60] sm:$0xff]
    %v478 = vld [vmem:[%s3 + $0x68] sm:$0xff]
    %v479 = vld [vmem:[%s3 + $0x70] sm:$0xff]
    %v480 = vld [vmem:[%s3 + $0x78] sm:$0xff]
    %v481 = vld [vmem:[%s3 + $0x80] sm:$0xff]
    %v482 = vld [vmem:[%s3 + $0x88] sm:$0xff]
    %v483 = vld [vmem:[%s3 + $0x90] sm:$0xff]
    %v484 = vld [vmem:[%s3 + $0x98] sm:$0xff]
    %v485 = vld [vmem:[%s3 + $0xa0] sm:$0xff]
    %v486 = vld [vmem:[%s3 + $0xa8] sm:$0xff]
    %v487 = vld [vmem:[%s3 + $0xb0] sm:$0xff]
    %v488 = vld [vmem:[%s3 + $0xb8] sm:$0xff]
    %v489 = vld [vmem:[%s3 + $0xc0] sm:$0xff]
    %v490 = vld [vmem:[%s3 + $0xc8] sm:$0xff]
    %v491 = vld [vmem:[%s3 + $0xd0] sm:$0xff]
    %v492 = vld [vmem:[%s3 + $0xd8] sm:$0xff]
    %v493 = vld [vmem:[%s3 + $0xe0] sm:$0xff]
    %v494 = vld [vmem:[%s3 + $0xe8] sm:$0xff]
    %v495 = vld [vmem:[%s3 + $0xf0] sm:$0xff]
    %v496 = vld [vmem:[%s3 + $0xf8] sm:$0xff]
    %v497 = vld [vmem:[%s3 + $0x100] sm:$0xff]
    %v498 = vld [vmem:[%s3 + $0x108] sm:$0xff]
    %v499 = vld [vmem:[%s3 + $0x110] sm:$0xff]
    %v500 = vld [vmem:[%s3 + $0x118] sm:$0xff]
    %v501 = vld [vmem:[%s3 + $0x120] sm:$0xff]
    %v502 = vld [vmem:[%s3 + $0x128] sm:$0xff]
    %v503 = vld [vmem:[%s3 + $0x130] sm:$0xff]
    %v504 = vld [vmem:[%s3 + $0x138] sm:$0xff]
    %v505 = vld [vmem:[%s3 + $0x140] sm:$0xff]
    %v506 = vld [vmem:[%s3 + $0x148] sm:$0xff]
    %v507 = vld [vmem:[%s3 + $0x150] sm:$0xff]
    %v508 = vld [vmem:[%s3 + $0x158] sm:$0xff]
    %v509 = vld [vmem:[%s3 + $0x160] sm:$0xff]
    %v510 = vld [vmem:[%s3 + $0x168] sm:$0xff]
    %v511 = vld [vmem:[%s3 + $0x170] sm:$0xff]
    %v512 = vld [vmem:[%s3 + $0x178] sm:$0xff]
    %v513 = vld [vmem:[%s3 + $0x180] sm:$0xff]
    %v514 = vld [vmem:[%s3 + $0x188] sm:$0xff]
    %v515 = vld [vmem:[%s3 + $0x190] sm:$0xff]
    %v516 = vld [vmem:[%s3 + $0x198] sm:$0xff]
    %v517 = vld [vmem:[%s3 + $0x1a0] sm:$0xff]
    %v518 = vld [vmem:[%s3 + $0x1a8] sm:$0xff]
    %v519 = vld [vmem:[%s3 + $0x1b0] sm:$0xff]
    %v520 = vld [vmem:[%s3 + $0x1b8] sm:$0xff]
    %v521 = vld [vmem:[%s3 + $0x1c0] sm:$0xff]
    %v522 = vld [vmem:[%s3 + $0x1c8] sm:$0xff]
    %v523 = vld [vmem:[%s3 + $0x1d0] sm:$0xff]
    %v524 = vld [vmem:[%s3 + $0x1d8] sm:$0xff]
    %v525 = vld [vmem:[%s3 + $0x1e0] sm:$0xff]
    %v526 = vld [vmem:[%s3 + $0x1e8] sm:$0xff]
    %v527 = vld [vmem:[%s3 + $0x1f0] sm:$0xff]
    %v528 = vld [vmem:[%s3 + $0x1f8] sm:$0xff]
    %v529 = vld [vmem:[%s3 + $0x200] sm:$0xff]
    %v530 = vld [vmem:[%s3 + $0x208] sm:$0xff]
    %v531 = vld [vmem:[%s3 + $0x210] sm:$0xff]
    %v532 = vld [vmem:[%s3 + $0x218] sm:$0xff]
    %v533 = vld [vmem:[%s3 + $0x220] sm:$0xff]
    %v534 = vld [vmem:[%s3 + $0x228] sm:$0xff]
    %v535 = vld [vmem:[%s3 + $0x230] sm:$0xff]
    %v536 = vld [vmem:[%s3 + $0x238] sm:$0xff]
    %v537 = vld [vmem:[%s3 + $0x240] sm:$0xff]
    %v538 = vld [vmem:[%s3 + $0x248] sm:$0xff]
    %v539 = vld [vmem:[%s3 + $0x250] sm:$0xff]
    %v540 = vld [vmem:[%s3 + $0x258] sm:$0xff]
    %v541 = vld [vmem:[%s3 + $0x260] sm:$0xff]
    %v542 = vld [vmem:[%s3 + $0x268] sm:$0xff]
    %v543 = vld [vmem:[%s3 + $0x270] sm:$0xff]
    %v544 = vld [vmem:[%s3 + $0x278] sm:$0xff]
    %v545 = vld [vmem:[%s3 + $0x280] sm:$0xff]
    %v546 = vld [vmem:[%s3 + $0x288] sm:$0xff]
    %v547 = vld [vmem:[%s3 + $0x290] sm:$0xff]
    %v548 = vld [vmem:[%s3 + $0x298] sm:$0xff]
    %v549 = vld [vmem:[%s3 + $0x2a0] sm:$0xff]
    %v550 = vld [vmem:[%s3 + $0x2a8] sm:$0xff]
    %v551 = vld [vmem:[%s3 + $0x2b0] sm:$0xff]
    %v552 = vld [vmem:[%s3 + $0x2b8] sm:$0xff]
    %v553 = vld [vmem:[%s3 + $0x2c0] sm:$0xff]
    %v554 = vld [vmem:[%s3 + $0x2c8] sm:$0xff]
    %v555 = vld [vmem:[%s3 + $0x2d0] sm:$0xff]
    %v556 = vld [vmem:[%s3 + $0x2d8] sm:$0xff]
    %v557 = vld [vmem:[%s3 + $0x2e0] sm:$0xff]
    %v558 = vld [vmem:[%s3 + $0x2e8] sm:$0xff]
    %v559 = vld [vmem:[%s3 + $0x2f0] sm:$0xff]
    %v560 = vld [vmem:[%s3 + $0x2f8] sm:$0xff]
    %v561 = vld [vmem:[%s3 + $0x300] sm:$0xff]
    %v562 = vld [vmem:[%s3 + $0x308] sm:$0xff]
    %v563 = vld [vmem:[%s3 + $0x310] sm:$0xff]
    %v564 = vld [vmem:[%s3 + $0x318] sm:$0xff]
    %v565 = vld [vmem:[%s3 + $0x320] sm:$0xff]
    %v566 = vld [vmem:[%s3 + $0x328] sm:$0xff]
    %v567 = vld [vmem:[%s3 + $0x330] sm:$0xff]
    %v568 = vld [vmem:[%s3 + $0x338] sm:$0xff]
    %v569 = vld [vmem:[%s3 + $0x340] sm:$0xff]
    %v570 = vld [vmem:[%s3 + $0x348] sm:$0xff]
    %v571 = vld [vmem:[%s3 + $0x350] sm:$0xff]
    %v572 = vld [vmem:[%s3 + $0x358] sm:$0xff]
    %v573 = vld [vmem:[%s3 + $0x360] sm:$0xff]
    %v574 = vld [vmem:[%s3 + $0x368] sm:$0xff]
    %v575 = vld [vmem:[%s3 + $0x370] sm:$0xff]
    %v576 = vld [vmem:[%s3 + $0x378] sm:$0xff]
    %v577 = vld [vmem:[%s3 + $0x380] sm:$0xff]
    %v578 = vld [vmem:[%s3 + $0x388] sm:$0xff]
    %v579 = vld [vmem:[%s3 + $0x390] sm:$0xff]
    %v580 = vld [vmem:[%s3 + $0x398] sm:$0xff]
    %v581 = vld [vmem:[%s3 + $0x3a0] sm:$0xff]
    %v582 = vld [vmem:[%s3 + $0x3a8] sm:$0xff]
    %v583 = vld [vmem:[%s3 + $0x3b0] sm:$0xff]
    %v584 = vld [vmem:[%s3 + $0x3b8] sm:$0xff]
    %v585 = vld [vmem:[%s3 + $0x3c0] sm:$0xff]
    %v586 = vld [vmem:[%s3 + $0x3c8] sm:$0xff]
    %v587 = vld [vmem:[%s3 + $0x3d0] sm:$0xff]
    %v588 = vld [vmem:[%s3 + $0x3d8] sm:$0xff]
    %v589 = vld [vmem:[%s3 + $0x3e0] sm:$0xff]
    %v590 = vld [vmem:[%s3 + $0x3e8] sm:$0xff]
    %v591 = vld [vmem:[%s3 + $0x3f0] sm:$0xff]
    %v592 = vld [vmem:[%s3 + $0x3f8] sm:$0xff]
    %v593 = vld [vmem:[%s4] sm:$0x1]
    %v595 = vlaneseq
    %v596 = vshrl.u32 %v595, 7
    %v597 = vsub.s32 0, %v596
    %v598 = vrot.slane %v593, %v597
    %600 = vmatprep.subr.mxu0 0.0
    %601 = vmatpush1.msra.mxu0 %v465
    %602 = vmatprep.subr.mxu0 0.0
    %603 = vmatpush1.msra.mxu0 %v466
    %604 = vmatprep.subr.mxu0 0.0
    %605 = vmatpush1.msra.mxu0 %v467
    %606 = vmatprep.subr.mxu0 0.0
    %607 = vmatpush1.msra.mxu0 %v468
    %608 = vmatprep.subr.mxu0 0.0
    %609 = vmatpush1.msra.mxu0 %v469
    %610 = vmatprep.subr.mxu0 0.0
    %611 = vmatpush1.msra.mxu0 %v470
    %612 = vmatprep.subr.mxu0 0.0
    %613 = vmatpush1.msra.mxu0 %v471
    %614 = vmatprep.subr.mxu0 0.0
    %615 = vmatpush1.msra.mxu0 %v472
    %616 = vmatprep.subr.mxu0 0.0
    %617 = vmatpush1.msra.mxu0 %v473
    %618 = vmatprep.subr.mxu0 0.0
    %619 = vmatpush1.msra.mxu0 %v474
    %620 = vmatprep.subr.mxu0 0.0
    %621 = vmatpush1.msra.mxu0 %v475
    %622 = vmatprep.subr.mxu0 0.0
    %623 = vmatpush1.msra.mxu0 %v476
    %624 = vmatprep.subr.mxu0 0.0
    %625 = vmatpush1.msra.mxu0 %v477
    %626 = vmatprep.subr.mxu0 0.0
    %627 = vmatpush1.msra.mxu0 %v478
    %628 = vmatprep.subr.mxu0 0.0
    %629 = vmatpush1.msra.mxu0 %v479
    %630 = vmatprep.subr.mxu0 0.0
    %631 = vmatpush1.msra.mxu0 %v480
    %632 = vmatprep.subr.mxu0 0.0
    %633 = vmatpush1.msra.mxu0 %v481
    %634 = vmatprep.subr.mxu0 0.0
    %635 = vmatpush1.msra.mxu0 %v482
    %636 = vmatprep.subr.mxu0 0.0
    %637 = vmatpush1.msra.mxu0 %v483
    %638 = vmatprep.subr.mxu0 0.0
    %639 = vmatpush1.msra.mxu0 %v484
    %640 = vmatprep.subr.mxu0 0.0
    %641 = vmatpush1.msra.mxu0 %v485
    %642 = vmatprep.subr.mxu0 0.0
    %643 = vmatpush1.msra.mxu0 %v486
    %644 = vmatprep.subr.mxu0 0.0
    %645 = vmatpush1.msra.mxu0 %v487
    %646 = vmatprep.subr.mxu0 0.0
    %647 = vmatpush1.msra.mxu0 %v488
    %648 = vmatprep.subr.mxu0 0.0
    %649 = vmatpush1.msra.mxu0 %v489
    %650 = vmatprep.subr.mxu0 0.0
    %651 = vmatpush1.msra.mxu0 %v490
    %652 = vmatprep.subr.mxu0 0.0
    %653 = vmatpush1.msra.mxu0 %v491
    %654 = vmatprep.subr.mxu0 0.0
    %655 = vmatpush1.msra.mxu0 %v492
    %656 = vmatprep.subr.mxu0 0.0
    %657 = vmatpush1.msra.mxu0 %v493
    %658 = vmatprep.subr.mxu0 0.0
    %659 = vmatpush1.msra.mxu0 %v494
    %660 = vmatprep.subr.mxu0 0.0
    %661 = vmatpush1.msra.mxu0 %v495
    %662 = vmatprep.subr.mxu0 0.0
    %663 = vmatpush1.msra.mxu0 %v496
    %664 = vmatprep.mubr.f32.mxu0 %v370
    %665 = vmatmul.mubr.f32.gmra.mrb[0].mxu0 %v369
    %v666 = vpop.f32.mrb[0].mxu0
    %v667 = vadd.f32 %v598, %v666
    %v668 = vpop.f32.mrb[0].mxu0
    %669 = vmatprep.mubr.f32.mxu0 %v372
    %670 = vmatmul.mubr.f32.gmra.mrb[0].mxu0 %v371
    %v671 = vpop.f32.mrb[0].mxu0
    %v672 = vadd.f32 %v598, %v671
    %v673 = vpop.f32.mrb[0].mxu0
    %674 = vmatprep.mubr.f32.mxu0 %v374
    %675 = vmatmul.mubr.f32.gmra.mrb[0].mxu0 %v373
    %v676 = vpop.f32.mrb[0].mxu0
    %v677 = vadd.f32 %v598, %v676
    %v678 = vpop.f32.mrb[0].mxu0
    %679 = vmatprep.mubr.f32.mxu0 %v376
    %680 = vmatmul.mubr.f32.gmra.mrb[0].mxu0 %v375
    %v681 = vpop.f32.mrb[0].mxu0
    %v682 = vadd.f32 %v598, %v681
    %v683 = vpop.f32.mrb[0].mxu0
    %684 = vdwg.mxu0
    %685 = vmatprep.subr.mxu0 0.0
    %686 = vmatpush1.msra.mxu0 %v497
    %687 = vmatprep.subr.mxu0 0.0
    %688 = vmatpush1.msra.mxu0 %v498
    %689 = vmatprep.subr.mxu0 0.0
    %690 = vmatpush1.msra.mxu0 %v499
    %691 = vmatprep.subr.mxu0 0.0
    %692 = vmatpush1.msra.mxu0 %v500
    %693 = vmatprep.subr.mxu0 0.0
    %694 = vmatpush1.msra.mxu0 %v501
    %695 = vmatprep.subr.mxu0 0.0
    %696 = vmatpush1.msra.mxu0 %v502
    %697 = vmatprep.subr.mxu0 0.0
    %698 = vmatpush1.msra.mxu0 %v503
    %699 = vmatprep.subr.mxu0 0.0
    %700 = vmatpush1.msra.mxu0 %v504
    %701 = vmatprep.subr.mxu0 0.0
    %702 = vmatpush1.msra.mxu0 %v505
    %703 = vmatprep.subr.mxu0 0.0
    %704 = vmatpush1.msra.mxu0 %v506
    %705 = vmatprep.subr.mxu0 0.0
    %706 = vmatpush1.msra.mxu0 %v507
    %707 = vmatprep.subr.mxu0 0.0
    %708 = vmatpush1.msra.mxu0 %v508
    %709 = vmatprep.subr.mxu0 0.0
    %710 = vmatpush1.msra.mxu0 %v509
    %711 = vmatprep.subr.mxu0 0.0
    %712 = vmatpush1.msra.mxu0 %v510
    %713 = vmatprep.subr.mxu0 0.0
    %714 = vmatpush1.msra.mxu0 %v511
    %715 = vmatprep.subr.mxu0 0.0
    %716 = vmatpush1.msra.mxu0 %v512
    %717 = vmatprep.subr.mxu0 0.0
    %718 = vmatpush1.msra.mxu0 %v513
    %719 = vmatprep.subr.mxu0 0.0
    %720 = vmatpush1.msra.mxu0 %v514
    %721 = vmatprep.subr.mxu0 0.0
    %722 = vmatpush1.msra.mxu0 %v515
    %723 = vmatprep.subr.mxu0 0.0
    %724 = vmatpush1.msra.mxu0 %v516
    %725 = vmatprep.subr.mxu0 0.0
    %726 = vmatpush1.msra.mxu0 %v517
    %727 = vmatprep.subr.mxu0 0.0
    %728 = vmatpush1.msra.mxu0 %v518
    %729 = vmatprep.subr.mxu0 0.0
    %730 = vmatpush1.msra.mxu0 %v519
    %731 = vmatprep.subr.mxu0 0.0
    %732 = vmatpush1.msra.mxu0 %v520
    %733 = vmatprep.subr.mxu0 0.0
    %734 = vmatpush1.msra.mxu0 %v521
    %735 = vmatprep.subr.mxu0 0.0
    %736 = vmatpush1.msra.mxu0 %v522
    %737 = vmatprep.subr.mxu0 0.0
    %738 = vmatpush1.msra.mxu0 %v523
    %739 = vmatprep.subr.mxu0 0.0
    %740 = vmatpush1.msra.mxu0 %v524
    %741 = vmatprep.subr.mxu0 0.0
    %742 = vmatpush1.msra.mxu0 %v525
    %743 = vmatprep.subr.mxu0 0.0
    %744 = vmatpush1.msra.mxu0 %v526
    %745 = vmatprep.subr.mxu0 0.0
    %746 = vmatpush1.msra.mxu0 %v527
    %747 = vmatprep.subr.mxu0 0.0
    %748 = vmatpush1.msra.mxu0 %v528
    %749 = vmatprep.mubr.f32.mxu0 %v390
    %750 = vmatmul.mubr.f32.gmra.mrb[0].mxu0 %v387
    %v751 = vpop.f32.mrb[0].mxu0
    %v752 = vadd.f32 %v667, %v751
    %v753 = vpop.f32.mrb[0].mxu0
    %754 = vmatprep.mubr.f32.mxu0 %v394
    %755 = vmatmul.mubr.f32.gmra.mrb[0].mxu0 %v392
    %v756 = vpop.f32.mrb[0].mxu0
    %v757 = vadd.f32 %v672, %v756
    %v758 = vpop.f32.mrb[0].mxu0
    %759 = vmatprep.mubr.f32.mxu0 %v398
    %760 = vmatmul.mubr.f32.gmra.mrb[0].mxu0 %v396
    %v761 = vpop.f32.mrb[0].mxu0
    %v762 = vadd.f32 %v677, %v761
    %v763 = vpop.f32.mrb[0].mxu0
    %764 = vmatprep.mubr.f32.mxu0 %v410
    %765 = vmatmul.mubr.f32.gmra.mrb[0].mxu0 %v409
    %v766 = vpop.f32.mrb[0].mxu0
    %v767 = vadd.f32 %v682, %v766
    %v768 = vpop.f32.mrb[0].mxu0
    %769 = vdwg.mxu0
    %770 = vmatprep.subr.mxu0 0.0
    %771 = vmatpush1.msra.mxu0 %v529
    %772 = vmatprep.subr.mxu0 0.0
    %773 = vmatpush1.msra.mxu0 %v530
    %774 = vmatprep.subr.mxu0 0.0
    %775 = vmatpush1.msra.mxu0 %v531
    %776 = vmatprep.subr.mxu0 0.0
    %777 = vmatpush1.msra.mxu0 %v532
    %778 = vmatprep.subr.mxu0 0.0
    %779 = vmatpush1.msra.mxu0 %v533
    %780 = vmatprep.subr.mxu0 0.0
    %781 = vmatpush1.msra.mxu0 %v534
    %782 = vmatprep.subr.mxu0 0.0
    %783 = vmatpush1.msra.mxu0 %v535
    %784 = vmatprep.subr.mxu0 0.0
    %785 = vmatpush1.msra.mxu0 %v536
    %786 = vmatprep.subr.mxu0 0.0
    %787 = vmatpush1.msra.mxu0 %v537
    %788 = vmatprep.subr.mxu0 0.0
    %789 = vmatpush1.msra.mxu0 %v538
    %790 = vmatprep.subr.mxu0 0.0
    %791 = vmatpush1.msra.mxu0 %v539
    %792 = vmatprep.subr.mxu0 0.0
    %793 = vmatpush1.msra.mxu0 %v540
    %794 = vmatprep.subr.mxu0 0.0
    %795 = vmatpush1.msra.mxu0 %v541
    %796 = vmatprep.subr.mxu0 0.0
    %797 = vmatpush1.msra.mxu0 %v542
    %798 = vmatprep.subr.mxu0 0.0
    %799 = vmatpush1.msra.mxu0 %v543
    %800 = vmatprep.subr.mxu0 0.0
    %801 = vmatpush1.msra.mxu0 %v544
    %802 = vmatprep.subr.mxu0 0.0
    %803 = vmatpush1.msra.mxu0 %v545
    %804 = vmatprep.subr.mxu0 0.0
    %805 = vmatpush1.msra.mxu0 %v546
    %806 = vmatprep.subr.mxu0 0.0
    %807 = vmatpush1.msra.mxu0 %v547
    %808 = vmatprep.subr.mxu0 0.0
    %809 = vmatpush1.msra.mxu0 %v548
    %810 = vmatprep.subr.mxu0 0.0
    %811 = vmatpush1.msra.mxu0 %v549
    %812 = vmatprep.subr.mxu0 0.0
    %813 = vmatpush1.msra.mxu0 %v550
    %814 = vmatprep.subr.mxu0 0.0
    %815 = vmatpush1.msra.mxu0 %v551
    %816 = vmatprep.subr.mxu0 0.0
    %817 = vmatpush1.msra.mxu0 %v552
    %818 = vmatprep.subr.mxu0 0.0
    %819 = vmatpush1.msra.mxu0 %v553
    %820 = vmatprep.subr.mxu0 0.0
    %821 = vmatpush1.msra.mxu0 %v554
    %822 = vmatprep.subr.mxu0 0.0
    %823 = vmatpush1.msra.mxu0 %v555
    %824 = vmatprep.subr.mxu0 0.0
    %825 = vmatpush1.msra.mxu0 %v556
    %826 = vmatprep.subr.mxu0 0.0
    %827 = vmatpush1.msra.mxu0 %v557
    %828 = vmatprep.subr.mxu0 0.0
    %829 = vmatpush1.msra.mxu0 %v558
    %830 = vmatprep.subr.mxu0 0.0
    %831 = vmatpush1.msra.mxu0 %v559
    %832 = vmatprep.subr.mxu0 0.0
    %833 = vmatpush1.msra.mxu0 %v560
    %834 = vmatprep.mubr.f32.mxu0 %v417
    %835 = vmatmul.mubr.f32.gmra.mrb[0].mxu0 %v414
    %v836 = vpop.f32.mrb[0].mxu0
    %v837 = vadd.f32 %v752, %v836
    %v838 = vpop.f32.mrb[0].mxu0
    %839 = vmatprep.mubr.f32.mxu0 %v421
    %840 = vmatmul.mubr.f32.gmra.mrb[0].mxu0 %v419
    %v841 = vpop.f32.mrb[0].mxu0
    %v842 = vadd.f32 %v757, %v841
    %v843 = vpop.f32.mrb[0].mxu0
    %844 = vmatprep.mubr.f32.mxu0 %v425
    %845 = vmatmul.mubr.f32.gmra.mrb[0].mxu0 %v423
    %v846 = vpop.f32.mrb[0].mxu0
    %v847 = vadd.f32 %v762, %v846
    %v848 = vpop.f32.mrb[0].mxu0
    %849 = vmatprep.mubr.f32.mxu0 %v437
    %850 = vmatmul.mubr.f32.gmra.mrb[0].mxu0 %v436
    %v851 = vpop.f32.mrb[0].mxu0
    %v852 = vadd.f32 %v767, %v851
    %v853 = vpop.f32.mrb[0].mxu0
    %854 = vdwg.mxu0
    %855 = vmatprep.subr.mxu0 0.0
    %856 = vmatpush1.msra.mxu0 %v561
    %857 = vmatprep.subr.mxu0 0.0
    %858 = vmatpush1.msra.mxu0 %v562
    %859 = vmatprep.subr.mxu0 0.0
    %860 = vmatpush1.msra.mxu0 %v563
    %861 = vmatprep.subr.mxu0 0.0
    %862 = vmatpush1.msra.mxu0 %v564
    %863 = vmatprep.subr.mxu0 0.0
    %864 = vmatpush1.msra.mxu0 %v565
    %865 = vmatprep.subr.mxu0 0.0
    %866 = vmatpush1.msra.mxu0 %v566
    %867 = vmatprep.subr.mxu0 0.0
    %868 = vmatpush1.msra.mxu0 %v567
    %869 = vmatprep.subr.mxu0 0.0
    %870 = vmatpush1.msra.mxu0 %v568
    %871 = vmatprep.subr.mxu0 0.0
    %872 = vmatpush1.msra.mxu0 %v569
    %873 = vmatprep.subr.mxu0 0.0
    %874 = vmatpush1.msra.mxu0 %v570
    %875 = vmatprep.subr.mxu0 0.0
    %876 = vmatpush1.msra.mxu0 %v571
    %877 = vmatprep.subr.mxu0 0.0
    %878 = vmatpush1.msra.mxu0 %v572
    %879 = vmatprep.subr.mxu0 0.0
    %880 = vmatpush1.msra.mxu0 %v573
    %881 = vmatprep.subr.mxu0 0.0
    %882 = vmatpush1.msra.mxu0 %v574
    %883 = vmatprep.subr.mxu0 0.0
    %884 = vmatpush1.msra.mxu0 %v575
    %885 = vmatprep.subr.mxu0 0.0
    %886 = vmatpush1.msra.mxu0 %v576
    %887 = vmatprep.subr.mxu0 0.0
    %888 = vmatpush1.msra.mxu0 %v577
    %889 = vmatprep.subr.mxu0 0.0
    %890 = vmatpush1.msra.mxu0 %v578
    %891 = vmatprep.subr.mxu0 0.0
    %892 = vmatpush1.msra.mxu0 %v579
    %893 = vmatprep.subr.mxu0 0.0
    %894 = vmatpush1.msra.mxu0 %v580
    %895 = vmatprep.subr.mxu0 0.0
    %896 = vmatpush1.msra.mxu0 %v581
    %897 = vmatprep.subr.mxu0 0.0
    %898 = vmatpush1.msra.mxu0 %v582
    %899 = vmatprep.subr.mxu0 0.0
    %900 = vmatpush1.msra.mxu0 %v583
    %901 = vmatprep.subr.mxu0 0.0
    %902 = vmatpush1.msra.mxu0 %v584
    %903 = vmatprep.subr.mxu0 0.0
    %904 = vmatpush1.msra.mxu0 %v585
    %905 = vmatprep.subr.mxu0 0.0
    %906 = vmatpush1.msra.mxu0 %v586
    %907 = vmatprep.subr.mxu0 0.0
    %908 = vmatpush1.msra.mxu0 %v587
    %909 = vmatprep.subr.mxu0 0.0
    %910 = vmatpush1.msra.mxu0 %v588
    %911 = vmatprep.subr.mxu0 0.0
    %912 = vmatpush1.msra.mxu0 %v589
    %913 = vmatprep.subr.mxu0 0.0
    %914 = vmatpush1.msra.mxu0 %v590
    %915 = vmatprep.subr.mxu0 0.0
    %916 = vmatpush1.msra.mxu0 %v591
    %917 = vmatprep.subr.mxu0 0.0
    %918 = vmatpush1.msra.mxu0 %v592
    %919 = vmatprep.mubr.f32.mxu0 %v444
    %920 = vmatmul.mubr.f32.gmra.mrb[0].mxu0 %v441
    %v921 = vpop.f32.mrb[0].mxu0
    %v922 = vadd.f32 %v837, %v921
    %v923 = vpop.f32.mrb[0].mxu0
    %924 = vmatprep.mubr.f32.mxu0 %v448
    %925 = vmatmul.mubr.f32.gmra.mrb[0].mxu0 %v446
    %v926 = vpop.f32.mrb[0].mxu0
    %v927 = vadd.f32 %v842, %v926
    %v928 = vpop.f32.mrb[0].mxu0
    %929 = vmatprep.mubr.f32.mxu0 %v452
    %930 = vmatmul.mubr.f32.gmra.mrb[0].mxu0 %v450
    %v931 = vpop.f32.mrb[0].mxu0
    %v932 = vadd.f32 %v847, %v931
    %v933 = vpop.f32.mrb[0].mxu0
    %934 = vmatprep.mubr.f32.mxu0 %v464
    %935 = vmatmul.mubr.f32.gmra.mrb[0].mxu0 %v463
    %v936 = vpop.f32.mrb[0].mxu0
    %v937 = vadd.f32 %v852, %v936
    %v938 = vpop.f32.mrb[0].mxu0
    %939 = vdwg.mxu0
    %v940 = vtanh.pop %v922
    %v941 = vtanh.pop %v927
    %v942 = vtanh.pop %v932
    %v943 = vtanh.pop %v937
    %948 = vrot.lane.b32.xlu0 %v940, 96
    %v949 = vpop.permute.xlu0 %948
    %950 = vrot.lane.b32.xlu0 %v941, 96
    %v951 = vpop.permute.xlu0 %950
    %952 = vrot.lane.b32.xlu0 %v942, 96
    %v953 = vpop.permute.xlu0 %952
    %954 = vrot.lane.b32.xlu0 %v943, 96
    %v955 = vpop.permute.xlu0 %954
    %v960 = vmax.f32 %v940, %v949
    %v961 = vmax.f32 %v941, %v951
    %v962 = vmax.f32 %v942, %v953
    %v963 = vmax.f32 %v943, %v955
    %v968 = vrot.slane %v960, 4
    %v969 = vrot.slane %v961, 4
    %v970 = vsel %vm411, %v968, %v969
    %v971 = vrot.slane %v962, 4
    %v972 = vsel %vm411, %v969, %v971
    %v973 = vrot.slane %v963, 4
    %v974 = vsel %vm411, %v971, %v973
    %v980 = vsel %vm411, %v973, %v968
    %v981 = vmax.f32 %v960, %v970
    %v982 = vmax.f32 %v961, %v972
    %v983 = vmax.f32 %v962, %v974
    %v984 = vmax.f32 %v963, %v980
    %v985 = vld [vmem:[%s7] sm:$0x3]
    %vm986 = vcmask 261120
    %v988 = vsel %vm986, %v985, 0
    %990 = vmatprep.subr.mxu0 0.0
    %991 = vmatpush1.msra.mxu0 %v981
    %992 = vmatprep.subr.mxu0 0.0
    %993 = vmatpush1.msra.mxu0 %v982
    %994 = vmatprep.subr.mxu0 0.0
    %995 = vmatpush1.msra.mxu0 %v983
    %996 = vmatprep.subr.mxu0 0.0
    %997 = vmatpush1.msra.mxu0 %v984
    %998 = vmatprep.subr.mxu0 0.0
    %999 = vmatpush1.msra.mxu0 0.0
    %1000 = vmatprep.subr.mxu0 0.0
    %1001 = vmatpush1.msra.mxu0 0.0
    %1002 = vmatprep.subr.mxu0 0.0
    %1003 = vmatpush1.msra.mxu0 0.0
    %1004 = vmatprep.subr.mxu0 0.0
    %1005 = vmatpush1.msra.mxu0 0.0
    %1006 = vmatprep.subr.mxu0 0.0
    %1007 = vmatpush1.msra.mxu0 0.0
    %1008 = vmatprep.subr.mxu0 0.0
    %1009 = vmatpush1.msra.mxu0 0.0
    %1010 = vmatprep.subr.mxu0 0.0
    %1011 = vmatpush1.msra.mxu0 0.0
    %1012 = vmatprep.subr.mxu0 0.0
    %1013 = vmatpush1.msra.mxu0 0.0
    %1014 = vmatprep.subr.mxu0 0.0
    %1015 = vmatpush1.msra.mxu0 0.0
    %1016 = vmatprep.subr.mxu0 0.0
    %1017 = vmatpush1.msra.mxu0 0.0
    %1018 = vmatprep.subr.mxu0 0.0
    %1019 = vmatpush1.msra.mxu0 0.0
    %1020 = vmatprep.subr.mxu0 0.0
    %1021 = vmatpush1.msra.mxu0 0.0
    %1022 = vmatprep.subr.mxu0 0.0
    %1023 = vmatpush1.msra.mxu0 0.0
    %1024 = vmatprep.subr.mxu0 0.0
    %1025 = vmatpush1.msra.mxu0 0.0
    %1026 = vmatprep.subr.mxu0 0.0
    %1027 = vmatpush1.msra.mxu0 0.0
    %1028 = vmatprep.subr.mxu0 0.0
    %1029 = vmatpush1.msra.mxu0 0.0
    %1030 = vmatprep.subr.mxu0 0.0
    %1031 = vmatpush1.msra.mxu0 0.0
    %1032 = vmatprep.subr.mxu0 0.0
    %1033 = vmatpush1.msra.mxu0 0.0
    %1034 = vmatprep.subr.mxu0 0.0
    %1035 = vmatpush1.msra.mxu0 0.0
    %1036 = vmatprep.subr.mxu0 0.0
    %1037 = vmatpush1.msra.mxu0 0.0
    %1038 = vmatprep.subr.mxu0 0.0
    %1039 = vmatpush1.msra.mxu0 0.0
    %1040 = vmatprep.subr.mxu0 0.0
    %1041 = vmatpush1.msra.mxu0 0.0
    %1042 = vmatprep.subr.mxu0 0.0
    %1043 = vmatpush1.msra.mxu0 0.0
    %1044 = vmatprep.subr.mxu0 0.0
    %1045 = vmatpush1.msra.mxu0 0.0
    %1046 = vmatprep.subr.mxu0 0.0
    %1047 = vmatpush1.msra.mxu0 0.0
    %1048 = vmatprep.subr.mxu0 0.0
    %1049 = vmatpush1.msra.mxu0 0.0
    %1050 = vmatprep.subr.mxu0 0.0
    %1051 = vmatpush1.msra.mxu0 0.0
    %1052 = vmatprep.subr.mxu0 0.0
    %1053 = vmatpush1.msra.mxu0 0.0
    %1054 = vmatprep.mubr.f32.mxu0 0.0
    %1055 = vmatmul.mubr.f32.gmra.mrb[0].mxu0 %v988
    %v1056 = vpop.f32.mrb[0].mxu0
    %v1057 = vadd.f32 0.0, %v1056
    %v1058 = vpop.f32.mrb[0].mxu0
    %1059 = vdwg.mxu0
    %v1060 = vld [vmem:[%s5] sm:$0xff]
    %v1061 = vld [vmem:[%s5 + $0x8] sm:$0xff]
    %v1062 = vld [vmem:[%s5 + $0x10] sm:$0xff]
    %v1063 = vld [vmem:[%s5 + $0x18] sm:$0xff]
    %v1064 = vld [vmem:[%s6] sm:$0x1]
    %v1066 = vlaneseq
    %v1067 = vshrl.u32 %v1066, 7
    %v1068 = vsub.s32 0, %v1067
    %v1069 = vrot.slane %v1064, %v1068
    %v1072 = vsel %vm986, %v1057, 0
    %1074 = vmatprep.subr.mxu0 0.0
    %1075 = vmatpush1.msra.mxu0 %v1060
    %1076 = vmatprep.subr.mxu0 0.0
    %1077 = vmatpush1.msra.mxu0 %v1061
    %1078 = vmatprep.subr.mxu0 0.0
    %1079 = vmatpush1.msra.mxu0 %v1062
    %1080 = vmatprep.subr.mxu0 0.0
    %1081 = vmatpush1.msra.mxu0 %v1063
    %1082 = vmatprep.subr.mxu0 0.0
    %1083 = vmatpush1.msra.mxu0 0.0
    %1084 = vmatprep.subr.mxu0 0.0
    %1085 = vmatpush1.msra.mxu0 0.0
    %1086 = vmatprep.subr.mxu0 0.0
    %1087 = vmatpush1.msra.mxu0 0.0
    %1088 = vmatprep.subr.mxu0 0.0
    %1089 = vmatpush1.msra.mxu0 0.0
    %1090 = vmatprep.subr.mxu0 0.0
    %1091 = vmatpush1.msra.mxu0 0.0
    %1092 = vmatprep.subr.mxu0 0.0
    %1093 = vmatpush1.msra.mxu0 0.0
    %1094 = vmatprep.subr.mxu0 0.0
    %1095 = vmatpush1.msra.mxu0 0.0
    %1096 = vmatprep.subr.mxu0 0.0
    %1097 = vmatpush1.msra.mxu0 0.0
    %1098 = vmatprep.subr.mxu0 0.0
    %1099 = vmatpush1.msra.mxu0 0.0
    %1100 = vmatprep.subr.mxu0 0.0
    %1101 = vmatpush1.msra.mxu0 0.0
    %1102 = vmatprep.subr.mxu0 0.0
    %1103 = vmatpush1.msra.mxu0 0.0
    %1104 = vmatprep.subr.mxu0 0.0
    %1105 = vmatpush1.msra.mxu0 0.0
    %1106 = vmatprep.subr.mxu0 0.0
    %1107 = vmatpush1.msra.mxu0 0.0
    %1108 = vmatprep.subr.mxu0 0.0
    %1109 = vmatpush1.msra.mxu0 0.0
    %1110 = vmatprep.subr.mxu0 0.0
    %1111 = vmatpush1.msra.mxu0 0.0
    %1112 = vmatprep.subr.mxu0 0.0
    %1113 = vmatpush1.msra.mxu0 0.0
    %1114 = vmatprep.subr.mxu0 0.0
    %1115 = vmatpush1.msra.mxu0 0.0
    %1116 = vmatprep.subr.mxu0 0.0
    %1117 = vmatpush1.msra.mxu0 0.0
    %1118 = vmatprep.subr.mxu0 0.0
    %1119 = vmatpush1.msra.mxu0 0.0
    %1120 = vmatprep.subr.mxu0 0.0
    %1121 = vmatpush1.msra.mxu0 0.0
    %1122 = vmatprep.subr.mxu0 0.0
    %1123 = vmatpush1.msra.mxu0 0.0
    %1124 = vmatprep.subr.mxu0 0.0
    %1125 = vmatpush1.msra.mxu0 0.0
    %1126 = vmatprep.subr.mxu0 0.0
    %1127 = vmatpush1.msra.mxu0 0.0
    %1128 = vmatprep.subr.mxu0 0.0
    %1129 = vmatpush1.msra.mxu0 0.0
    %1130 = vmatprep.subr.mxu0 0.0
    %1131 = vmatpush1.msra.mxu0 0.0
    %1132 = vmatprep.subr.mxu0 0.0
    %1133 = vmatpush1.msra.mxu0 0.0
    %1134 = vmatprep.subr.mxu0 0.0
    %1135 = vmatpush1.msra.mxu0 0.0
    %1136 = vmatprep.subr.mxu0 0.0
    %1137 = vmatpush1.msra.mxu0 0.0
    %1138 = vmatprep.mubr.f32.mxu0 0.0
    %1139 = vmatmul.mubr.f32.gmra.mrb[0].mxu0 %v1072
    %v1140 = vpop.f32.mrb[0].mxu0
    %v1141 = vadd.f32 %v1069, %v1140
    %v1142 = vpop.f32.mrb[0].mxu0
    %1143 = vdwg.mxu0
    %1144 = vst [vmem:[#allocation2] sm:$0x3] %v1141
    // Predicated region
    $region34: #{mnist_tanh_forward.1} parent=1 // pred_check
      _
    $region35: #{mnist_tanh_forward.1} parent=1 // pred_check_branch
      %1146 = sbr.rel (0) target = $region37
    $region36: #{mnist_tanh_forward.1} parent=1 // pred_region
      %s1148 = ssub.s32 32, 32
      %1149 = vsyncadd [#allocation3], %s1148
      %s1151 = sshll.u32 [#allocation2], 4
      %s1152 = int_to_ptr.vmem [resolvable:$true] %s1151
      %1154 = dma.vmem_to_hbm [thread:$0]  %s1152, 32, %s8, [#allocation3]
    $region37: #{mnist_tanh_forward.1} parent=1 // pred_fallthru
      _
    // Predicated region
    $region38: #{mnist_tanh_forward.1} parent=1 // pred_check
      _
    $region39: #{mnist_tanh_forward.1} parent=1 // pred_check_branch
      %1156 = sbr.rel (0) target = $region41
    $region40: #{mnist_tanh_forward.1} parent=1 // pred_region
      %1157 = dma.done [#allocation3], 32
    $region41: #{mnist_tanh_forward.1} parent=1 // pred_fallthru
      _
    %1158 = vsyncpa [#allocation3], 1

</llo_original>
